<compile_context>
chip_gen: v6e
topology: v6e:2x2x1
jax: 0.10.0
libtpu: 0.0.40
codegen_flags: <defaults>
</compile_context>

<pallas_src>
import functools

import jax
import jax.numpy as jnp
from jax import lax
from jax.experimental import pallas as pl
from jax.experimental.pallas import tpu as pltpu

LN_EPS = 1e-6


def _round_up(n, m):
    return (n + m - 1) // m * m


def _mlp_kernel(x_ref, g_ref, beta_ref, w0_ref, b0_ref, w1_ref, b1_ref,
                o_ref, xn_ref, acc_ref, *, d_real, d_pad):
    k = pl.program_id(1)
    nk = pl.num_programs(1)

    # --- per row-tile prologue: pre-LayerNorm once, zero the accumulator ---
    @pl.when(k == 0)
    def _():
        x = x_ref[...].astype(jnp.float32)                    # (TM, Dp)
        inv_d = 1.0 / d_real
        if d_pad == d_real:
            mean = jnp.mean(x, axis=-1, keepdims=True)
            centered = x - mean
            var = jnp.mean(centered * centered, axis=-1, keepdims=True)
        else:
            # padded lanes of x are zero; LN statistics over the REAL D only.
            lane = lax.broadcasted_iota(jnp.int32, (1, d_pad), 1)
            valid = lane < d_real                             # (1, Dp)
            mean = jnp.sum(x, axis=-1, keepdims=True) * inv_d
            centered = jnp.where(valid, x - mean, 0.0)
            var = jnp.sum(centered * centered, axis=-1, keepdims=True) * inv_d
        xn = centered * lax.rsqrt(var + LN_EPS)
        xn = xn * g_ref[...] + beta_ref[...]                  # (TM, Dp)
        xn_ref[...] = xn.astype(jnp.bfloat16)
        acc_ref[...] = jnp.zeros_like(acc_ref)

    # --- one hidden tile: ReLU(xn @ W0[:, k]) @ W1[k, :], f32 accumulate ---
    h = jnp.dot(xn_ref[...], w0_ref[...],
                preferred_element_type=jnp.float32) + b0_ref[...]
    h = jnp.maximum(h, 0.0)                                   # (TM, tH)
    acc_ref[...] += jnp.dot(h.astype(jnp.bfloat16), w1_ref[...],
                            preferred_element_type=jnp.float32)

    # --- epilogue: output bias + residual (re-read original x), store ---
    @pl.when(k == nk - 1)
    def _():
        y = acc_ref[...] + b1_ref[...] + x_ref[...].astype(jnp.float32)
        o_ref[...] = y.astype(o_ref.dtype)


def prepare_mlp_params(gamma, beta, w0, b0, w1, b1, *, hidden_tile=512):
    """One-time weight preprocessing: pad to lane-dense tiles, cast to bf16.

    gamma/beta: [1, D].  w0: [D, H], b0: [1, H].  w1: [H, D], b1: [1, D].
    Zero padding keeps the math exact (padded hidden units contribute 0)."""
    D, H = w0.shape
    Dp = _round_up(D, 128)
    Hp = _round_up(H, 128)
    tH = min(hidden_tile, Hp)
    Hp = _round_up(Hp, tH)            # reduction grid must divide Hp evenly
    return dict(
        d=D, d_pad=Dp, h_pad=Hp, t_h=tH,
        gamma=jnp.pad(gamma.astype(jnp.float32), ((0, 0), (0, Dp - D))),
        beta=jnp.pad(beta.astype(jnp.float32), ((0, 0), (0, Dp - D))),
        w0=jnp.pad(w0, ((0, Dp - D), (0, Hp - H))).astype(jnp.bfloat16),
        b0=jnp.pad(b0.astype(jnp.float32), ((0, 0), (0, Hp - H))),
        w1=jnp.pad(w1, ((0, Hp - H), (0, Dp - D))).astype(jnp.bfloat16),
        b1=jnp.pad(b1.astype(jnp.float32), ((0, 0), (0, Dp - D))),
    )


def mlp_forward(x, params, *, tile_rows=512):
    """x: [B, S, D].  Returns [B, S, D] (same dtype as x)."""
    B, S, D = x.shape
    assert D == params["d"], "input feature dim must match prepared params"
    Dp, Hp, tH = params["d_pad"], params["h_pad"], params["t_h"]
    rows = B * S

    x2 = x.reshape(rows, D)
    if Dp != D:
        # ragged feature dim only: pad lanes so stores are lane-dense.
        x2 = jnp.pad(x2, ((0, 0), (0, Dp - D)))

    out_bytes = jnp.dtype(x.dtype).itemsize
    # ---- row tile: big tiles (mem-bound), VMEM-budgeted, >=2 parallel steps --
    per_row = (2 * Dp * 4          # x tile, double-buffered, f32
               + 2 * Dp * out_bytes  # out tile, double-buffered
               + Dp * 4            # f32 accumulator scratch
               + Dp * 2            # bf16 LN(x) scratch
               + tH * 4)           # f32 hidden temporary
    weight_bytes = (2 * (Dp * tH * 2 + tH * Dp * 2 + tH * 4)  # W0/W1/b0 tiles, dbl-buf
                    + 3 * Dp * 4)                             # gamma/beta/b1
    budget = 40 * 1024 * 1024 - weight_bytes
    tm_cap = max(8, (budget // per_row) // 8 * 8)
    tm = min(tile_rows, tm_cap, _round_up(rows, 8))
    if rows > 8 and pl.cdiv(rows, tm) < 2:
        # keep >= 2 grid steps on the parallel row axis (v7x has 2 TCs)
        tm = _round_up(pl.cdiv(rows, 2), 8)

    n_row_tiles = pl.cdiv(rows, tm)
    n_h_tiles = Hp // tH
    vmem_limit = int(min(64 << 20,
                         max(32 << 20, 2 * (weight_bytes + tm * per_row))))

    out = pl.pallas_call(
        functools.partial(_mlp_kernel, d_real=D, d_pad=Dp),
        out_shape=jax.ShapeDtypeStruct((rows, Dp), x.dtype),
        grid_spec=pltpu.PrefetchScalarGridSpec(
            num_scalar_prefetch=0,
            grid=(n_row_tiles, n_h_tiles),
            in_specs=[
                pl.BlockSpec((tm, Dp), lambda i, k: (i, 0)),   # x (resident over k)
                pl.BlockSpec((1, Dp), lambda i, k: (0, 0)),    # LN gamma
                pl.BlockSpec((1, Dp), lambda i, k: (0, 0)),    # LN beta
                pl.BlockSpec((Dp, tH), lambda i, k: (0, k)),   # W0 hidden tile (bf16)
                pl.BlockSpec((1, tH), lambda i, k: (0, k)),    # b0 hidden tile
                pl.BlockSpec((tH, Dp), lambda i, k: (k, 0)),   # W1 hidden tile (bf16)
                pl.BlockSpec((1, Dp), lambda i, k: (0, 0)),    # b1
            ],
            out_specs=pl.BlockSpec((tm, Dp), lambda i, k: (i, 0)),
            scratch_shapes=[pltpu.VMEM((tm, Dp), jnp.bfloat16),   # LN(x)
                            pltpu.VMEM((tm, Dp), jnp.float32)],   # accumulator
        ),
        compiler_params=pltpu.CompilerParams(
            dimension_semantics=("parallel", "arbitrary"),
            vmem_limit_bytes=vmem_limit),
    )(x2, params["gamma"], params["beta"], params["w0"], params["b0"],
      params["w1"], params["b1"])

    if Dp != D:
        out = out[:, :D]
    return out.reshape(B, S, D)


def _xavier_uniform(key, fan_in, fan_out, dtype=jnp.float32):
    # matches nn.init.xavier_uniform_ bound; stored as [in, out]
    bound = (6.0 / (fan_in + fan_out)) ** 0.5
    return jax.random.uniform(key, (fan_in, fan_out), dtype, -bound, bound)


def _linear_bias(key, fan_in, fan_out, dtype=jnp.float32):
    # PyTorch Linear default bias init: U(-1/sqrt(fan_in), 1/sqrt(fan_in))
    bound = 1.0 / (fan_in ** 0.5)
    return jax.random.uniform(key, (1, fan_out), dtype, -bound, bound)


def _reference(x, gamma, beta, w0, b0, w1, b1):
    # Pure-f32 reference mirroring the PyTorch module forward.
    x = x.astype(jnp.float32)
    mean = jnp.mean(x, axis=-1, keepdims=True)
    var = jnp.mean((x - mean) ** 2, axis=-1, keepdims=True)
    xn = (x - mean) * lax.rsqrt(var + LN_EPS) * gamma[0] + beta[0]
    h = jnp.maximum(xn @ w0 + b0[0], 0.0)
    y = h @ w1 + b1[0]
    return y + x


if __name__ == "__main__":
    B, S = 2, 8           # 16 rows total
    D, H = 32, 64         # input_size = output_size = 32 (residual), hidden = 64

    key = jax.random.PRNGKey(0)
    kx, kw0, kb0, kw1, kb1 = jax.random.split(key, 5)

    x = jax.random.normal(kx, (B, S, D), jnp.float32)
    gamma = jnp.ones((1, D), jnp.float32)
    beta = jnp.zeros((1, D), jnp.float32)
    w0 = _xavier_uniform(kw0, D, H)
    b0 = _linear_bias(kb0, D, H)
    w1 = _xavier_uniform(kw1, H, D)
    b1 = _linear_bias(kb1, H, D)

    params = prepare_mlp_params(gamma, beta, w0, b0, w1, b1)

    out = mlp_forward(x, params)
    out = jax.block_until_ready(out)

    ref = _reference(x, gamma, beta, w0, b0, w1, b1)
    assert out.shape == (B, S, D)
    # Tolerance accounts for bf16 matmul inputs (f32 accumulation) in-kernel.
    assert jnp.allclose(out, ref, atol=2e-2, rtol=2e-2), "mismatch vs reference"

    print("KERNEL_OK")
</pallas_src>

<mosaic_0001>
module attributes {stable_mosaic.version = 11 : i64} {
  func.func @_mlp_kernel(%arg0: i32, %arg1: i32, %arg2: memref<8x128xf32, #tpu.memory_space<vmem>>, %arg3: memref<1x128xf32, #tpu.memory_space<vmem>>, %arg4: memref<1x128xf32, #tpu.memory_space<vmem>>, %arg5: memref<128x128xbf16, #tpu.memory_space<vmem>>, %arg6: memref<1x128xf32, #tpu.memory_space<vmem>>, %arg7: memref<128x128xbf16, #tpu.memory_space<vmem>>, %arg8: memref<1x128xf32, #tpu.memory_space<vmem>>, %arg9: memref<8x128xf32, #tpu.memory_space<vmem>>, %arg10: memref<8x128xbf16, #tpu.memory_space<vmem>>, %arg11: memref<8x128xf32, #tpu.memory_space<vmem>>) attributes {dimension_semantics = [#tpu.dimension_semantics<parallel>, #tpu.dimension_semantics<arbitrary>], iteration_bounds = array<i64: 2, 1>, scalar_prefetch = 0 : i64, scratch_operands = 2 : i64, tpu.core_type = #tpu.core_type<tc>, window_params = [{transform_indices = @transform_0, window_bounds = array<i64: 8, 128>}, {pipeline_mode = #tpu.pipeline_mode<synchronous>, transform_indices = @transform_1, window_bounds = array<i64: 1, 128>}, {pipeline_mode = #tpu.pipeline_mode<synchronous>, transform_indices = @transform_2, window_bounds = array<i64: 1, 128>}, {transform_indices = @transform_3, window_bounds = array<i64: 128, 128>}, {transform_indices = @transform_4, window_bounds = array<i64: 1, 128>}, {transform_indices = @transform_5, window_bounds = array<i64: 128, 128>}, {pipeline_mode = #tpu.pipeline_mode<synchronous>, transform_indices = @transform_6, window_bounds = array<i64: 1, 128>}, {transform_indices = @transform_7, window_bounds = array<i64: 8, 128>}]} {
    %c0_i32 = arith.constant 0 : i32
    %0 = arith.cmpi eq, %arg1, %c0_i32 : i32
    %1 = arith.extui %0 : i1 to i32
    %c0_i32_0 = arith.constant 0 : i32
    %2 = arith.cmpi ne, %1, %c0_i32_0 : i32
    scf.if %2 {
      %c0_16 = arith.constant 0 : index
      %c0_17 = arith.constant 0 : index
      %20 = vector.load %arg2[%c0_16, %c0_17] : memref<8x128xf32, #tpu.memory_space<vmem>>, vector<8x128xf32>
      %21 = tpu.iota {dimensions = array<i32: 1>} : vector<1x128xi32>
      %c32_i32 = arith.constant 32 : i32
      %22 = vector.broadcast %c32_i32 : i32 to vector<1x128xi32>
      %23 = arith.cmpi slt, %21, %22 : vector<1x128xi32>
      %cst_18 = arith.constant dense<0.000000e+00> : vector<8xf32>
      %24 = vector.multi_reduction <add>, %20, %cst_18 [1] : vector<8x128xf32> to vector<8xf32>
      %25 = vector.shape_cast %24 : vector<8xf32> to vector<8x1xf32>
      %cst_19 = arith.constant 3.125000e-02 : f32
      %26 = vector.broadcast %cst_19 : f32 to vector<8x1xf32>
      %27 = arith.mulf %25, %26 : vector<8x1xf32>
      %28 = vector.broadcast %27 : vector<8x1xf32> to vector<8x128xf32>
      %29 = arith.subf %20, %28 : vector<8x128xf32>
      %cst_20 = arith.constant 0.000000e+00 : f32
      %30 = vector.shape_cast %23 : vector<1x128xi1> to vector<1x128xi1>
      %31 = vector.broadcast %30 : vector<1x128xi1> to vector<8x128xi1>
      %32 = vector.broadcast %cst_20 : f32 to vector<8x128xf32>
      %33 = arith.select %31, %29, %32 : vector<8x128xi1>, vector<8x128xf32>
      %34 = arith.mulf %33, %33 : vector<8x128xf32>
      %cst_21 = arith.constant dense<0.000000e+00> : vector<8xf32>
      %35 = vector.multi_reduction <add>, %34, %cst_21 [1] : vector<8x128xf32> to vector<8xf32>
      %36 = vector.shape_cast %35 : vector<8xf32> to vector<8x1xf32>
      %cst_22 = arith.constant 3.125000e-02 : f32
      %37 = vector.broadcast %cst_22 : f32 to vector<8x1xf32>
      %38 = arith.mulf %36, %37 : vector<8x1xf32>
      %cst_23 = arith.constant 9.99999997E-7 : f32
      %39 = vector.broadcast %cst_23 : f32 to vector<8x1xf32>
      %40 = arith.addf %38, %39 : vector<8x1xf32>
      %41 = math.rsqrt %40 : vector<8x1xf32>
      %42 = vector.broadcast %41 : vector<8x1xf32> to vector<8x128xf32>
      %43 = arith.mulf %33, %42 : vector<8x128xf32>
      %c0_24 = arith.constant 0 : index
      %c0_25 = arith.constant 0 : index
      %44 = vector.load %arg3[%c0_24, %c0_25] : memref<1x128xf32, #tpu.memory_space<vmem>>, vector<1x128xf32>
      %45 = vector.broadcast %44 : vector<1x128xf32> to vector<8x128xf32>
      %46 = arith.mulf %43, %45 : vector<8x128xf32>
      %c0_26 = arith.constant 0 : index
      %c0_27 = arith.constant 0 : index
      %47 = vector.load %arg4[%c0_26, %c0_27] : memref<1x128xf32, #tpu.memory_space<vmem>>, vector<1x128xf32>
      %48 = vector.broadcast %47 : vector<1x128xf32> to vector<8x128xf32>
      %49 = arith.addf %46, %48 : vector<8x128xf32>
      %50 = arith.truncf %49 : vector<8x128xf32> to vector<8x128xbf16>
      %c0_28 = arith.constant 0 : index
      %c0_29 = arith.constant 0 : index
      %51 = vector.load %arg10[%c0_28, %c0_29] : memref<8x128xbf16, #tpu.memory_space<vmem>>, vector<8x128xbf16>
      tpu.vector_store %arg10[%c0_28, %c0_29], %50 {strides = array<i32>} : memref<8x128xbf16, #tpu.memory_space<vmem>>, vector<8x128xbf16>,
      %cst_30 = arith.constant 0.000000e+00 : f32
      %52 = vector.broadcast %cst_30 : f32 to vector<8x128xf32>
      %c0_31 = arith.constant 0 : index
      %c0_32 = arith.constant 0 : index
      %53 = vector.load %arg11[%c0_31, %c0_32] : memref<8x128xf32, #tpu.memory_space<vmem>>, vector<8x128xf32>
      tpu.vector_store %arg11[%c0_31, %c0_32], %52 {strides = array<i32>} : memref<8x128xf32, #tpu.memory_space<vmem>>, vector<8x128xf32>,
    } else {
    }
    %c0 = arith.constant 0 : index
    %c0_1 = arith.constant 0 : index
    %3 = vector.load %arg10[%c0, %c0_1] : memref<8x128xbf16, #tpu.memory_space<vmem>>, vector<8x128xbf16>
    %c0_2 = arith.constant 0 : index
    %c0_3 = arith.constant 0 : index
    %4 = vector.load %arg5[%c0_2, %c0_3] : memref<128x128xbf16, #tpu.memory_space<vmem>>, vector<128x128xbf16>
    %cst = arith.constant dense<0.000000e+00> : vector<8x128xf32>
    %5 = tpu.matmul %3, %4, %cst {dimension_numbers = #tpu.dot_dimension_numbers<[1], [0], [0], [1], [0, 0, 1, 1], [], []>} : vector<8x128xbf16>, vector<128x128xbf16>, vector<8x128xf32> -> vector<8x128xf32>
    %c0_4 = arith.constant 0 : index
    %c0_5 = arith.constant 0 : index
    %6 = vector.load %arg6[%c0_4, %c0_5] : memref<1x128xf32, #tpu.memory_space<vmem>>, vector<1x128xf32>
    %7 = vector.broadcast %6 : vector<1x128xf32> to vector<8x128xf32>
    %8 = arith.addf %5, %7 : vector<8x128xf32>
    %cst_6 = arith.constant 0.000000e+00 : f32
    %9 = vector.broadcast %cst_6 : f32 to vector<8x128xf32>
    %10 = arith.maximumf %8, %9 : vector<8x128xf32>
    %c0_7 = arith.constant 0 : index
    %c0_8 = arith.constant 0 : index
    %11 = vector.load %arg11[%c0_7, %c0_8] : memref<8x128xf32, #tpu.memory_space<vmem>>, vector<8x128xf32>
    %12 = arith.truncf %10 : vector<8x128xf32> to vector<8x128xbf16>
    %c0_9 = arith.constant 0 : index
    %c0_10 = arith.constant 0 : index
    %13 = vector.load %arg7[%c0_9, %c0_10] : memref<128x128xbf16, #tpu.memory_space<vmem>>, vector<128x128xbf16>
    %cst_11 = arith.constant dense<0.000000e+00> : vector<8x128xf32>
    %14 = tpu.matmul %12, %13, %cst_11 {dimension_numbers = #tpu.dot_dimension_numbers<[1], [0], [0], [1], [0, 0, 1, 1], [], []>} : vector<8x128xbf16>, vector<128x128xbf16>, vector<8x128xf32> -> vector<8x128xf32>
    %15 = arith.addf %11, %14 : vector<8x128xf32>
    %c0_12 = arith.constant 0 : index
    %c0_13 = arith.constant 0 : index
    %16 = vector.load %arg11[%c0_12, %c0_13] : memref<8x128xf32, #tpu.memory_space<vmem>>, vector<8x128xf32>
    tpu.vector_store %arg11[%c0_12, %c0_13], %15 {strides = array<i32>} : memref<8x128xf32, #tpu.memory_space<vmem>>, vector<8x128xf32>,
    %c0_i32_14 = arith.constant 0 : i32
    %17 = arith.cmpi eq, %arg1, %c0_i32_14 : i32
    %18 = arith.extui %17 : i1 to i32
    %c0_i32_15 = arith.constant 0 : i32
    %19 = arith.cmpi ne, %18, %c0_i32_15 : i32
    scf.if %19 {
      %c0_16 = arith.constant 0 : index
      %c0_17 = arith.constant 0 : index
      %20 = vector.load %arg11[%c0_16, %c0_17] : memref<8x128xf32, #tpu.memory_space<vmem>>, vector<8x128xf32>
      %c0_18 = arith.constant 0 : index
      %c0_19 = arith.constant 0 : index
      %21 = vector.load %arg8[%c0_18, %c0_19] : memref<1x128xf32, #tpu.memory_space<vmem>>, vector<1x128xf32>
      %22 = vector.broadcast %21 : vector<1x128xf32> to vector<8x128xf32>
      %23 = arith.addf %20, %22 : vector<8x128xf32>
      %c0_20 = arith.constant 0 : index
      %c0_21 = arith.constant 0 : index
      %24 = vector.load %arg2[%c0_20, %c0_21] : memref<8x128xf32, #tpu.memory_space<vmem>>, vector<8x128xf32>
      %25 = arith.addf %23, %24 : vector<8x128xf32>
      %c0_22 = arith.constant 0 : index
      %c0_23 = arith.constant 0 : index
      %26 = vector.load %arg9[%c0_22, %c0_23] : memref<8x128xf32, #tpu.memory_space<vmem>>, vector<8x128xf32>
      tpu.vector_store %arg9[%c0_22, %c0_23], %25 {strides = array<i32>} : memref<8x128xf32, #tpu.memory_space<vmem>>, vector<8x128xf32>,
    } else {
    }
    return
  }
  func.func @transform_0(%arg0: i32, %arg1: i32) -> (i32, i32) {
    %c0_i32 = arith.constant 0 : i32
    %c0_i32_0 = arith.constant 0 : i32
    return %arg0, %c0_i32 : i32, i32
  }
  func.func @transform_1(%arg0: i32, %arg1: i32) -> (i32, i32) {
    %c0_i32 = arith.constant 0 : i32
    %c0_i32_0 = arith.constant 0 : i32
    %c0_i32_1 = arith.constant 0 : i32
    return %c0_i32, %c0_i32_0 : i32, i32
  }
  func.func @transform_2(%arg0: i32, %arg1: i32) -> (i32, i32) {
    %c0_i32 = arith.constant 0 : i32
    %c0_i32_0 = arith.constant 0 : i32
    %c0_i32_1 = arith.constant 0 : i32
    return %c0_i32, %c0_i32_0 : i32, i32
  }
  func.func @transform_3(%arg0: i32, %arg1: i32) -> (i32, i32) {
    %c0_i32 = arith.constant 0 : i32
    %c0_i32_0 = arith.constant 0 : i32
    return %c0_i32, %arg1 : i32, i32
  }
  func.func @transform_4(%arg0: i32, %arg1: i32) -> (i32, i32) {
    %c0_i32 = arith.constant 0 : i32
    %c0_i32_0 = arith.constant 0 : i32
    return %c0_i32, %arg1 : i32, i32
  }
  func.func @transform_5(%arg0: i32, %arg1: i32) -> (i32, i32) {
    %c0_i32 = arith.constant 0 : i32
    %c0_i32_0 = arith.constant 0 : i32
    return %arg1, %c0_i32 : i32, i32
  }
  func.func @transform_6(%arg0: i32, %arg1: i32) -> (i32, i32) {
    %c0_i32 = arith.constant 0 : i32
    %c0_i32_0 = arith.constant 0 : i32
    %c0_i32_1 = arith.constant 0 : i32
    return %c0_i32, %c0_i32_0 : i32, i32
  }
  func.func @transform_7(%arg0: i32, %arg1: i32) -> (i32, i32) {
    %c0_i32 = arith.constant 0 : i32
    %c0_i32_0 = arith.constant 0 : i32
    return %arg0, %c0_i32 : i32, i32
  }
}

</mosaic_0001>

<llo_original>
// kernel: tpu_custom_call.1
$region0: #{tpu_custom_call.1}
  #allocation0 [shape = 'u32[]', space=smem, size = 0x4, offset = 0x4, fixed_abs, tag = 'smem constant byte address 0x4 - core index']
  #allocation1 [shape = 'u32[144,128]{1,0:T(1,128)}', space=vmem, size = 0x12000, scoped, tag = 'internal scratch']
  #allocation2 [shape = 'bf16[8,128]{1,0:T(8,128)(2,1)}', space=vmem, size = 0x800, scoped, tag = 'scratch operand']
  #allocation3 [shape = 'f32[8,128]{1,0:T(8,128)}', space=vmem, size = 0x1000, scoped, tag = 'scratch operand']
  %s0 = inlined_call_operand.hbm [shape: f32[16,128], index: 0, kind: input, shape index: {}]
  %s1 = inlined_call_operand.vmem [shape: f32[1,128], index: 1, kind: input, shape index: {}]
  %s2 = inlined_call_operand.vmem [shape: f32[1,128], index: 2, kind: input, shape index: {}]
  %s3 = inlined_call_operand.hbm [shape: bf16[128,128], index: 3, kind: input, shape index: {}]
  %s4 = inlined_call_operand.vmem [shape: f32[1,128], index: 4, kind: input, shape index: {}]
  %s5 = inlined_call_operand.hbm [shape: bf16[128,128], index: 5, kind: input, shape index: {}]
  %s6 = inlined_call_operand.vmem [shape: f32[1,128], index: 6, kind: input, shape index: {}]
  %s7 = inlined_call_operand.hbm [shape: f32[16,128], index: 7, kind: output, shape index: {}]
  %s8 = sld [smem:[#allocation0]]
  $region81: #{tpu_custom_call.1} parent=0
    _
  %s10 = ssub.s32 1, %s8
  %s11 = scalar_select 0, %s10, %s8
  $region1: #{tpu_custom_call.1} parent=0
    #allocation4 [shape = 'u8[8192]{0}', space=vmem, size = 0x2000, scoped, tag = 'input window, operand 0']
    #allocation5 [shape = 's32[2]{0}', space=sflag, size = 0x8, scoped, tag = 'scoped memory for tpu_custom_call.1']
    #allocation6 [shape = 's32[2]{0}', space=sflag, size = 0x8, scoped, tag = 'scoped memory for tpu_custom_call.1']
    #allocation7 [shape = 'u8[32768]{0}', space=vmem, size = 0x8000, scoped, tag = 'input window, operand 3, single buffered']
    #allocation8 [shape = 's32[1]{0}', space=sflag, size = 0x4, scoped, tag = 'scoped memory for tpu_custom_call.1']
    #allocation9 [shape = 'u8[32768]{0}', space=vmem, size = 0x8000, scoped, tag = 'input window, operand 5, single buffered']
    #allocation10 [shape = 'u8[8192]{0}', space=vmem, size = 0x2000, scoped, tag = 'output window, operand 0']
    %12 = vsyncpa [#allocation5], 0
    %s13 = scalar_lea.sflag [#allocation5], 1
    %14 = vsyncpa %s13, 0
    %15 = vsyncpa [#allocation8], 0
    %16 = vsyncpa [#allocation6], 0
    %s17 = scalar_lea.sflag [#allocation6], 1
    %18 = vsyncpa %s17, 0
    loop: start=0, step=1, limit=4
    $region2: #{tpu_custom_call.1} parent=1 // loop_pre_header
      _
    $region3: #{tpu_custom_call.1} parent=1 // loop_header
      %s20 = sphi 0, %s24
      %p21 = scmp.ge.s32.totalorder %s20, 4
      %s27 = sphi 0, %s39
      %s28 = sphi 0, %s35
      %s29 = sphi 0, %s27
      %s30 = sphi 0, %s28
      %s31 = sphi 0, %s29
      %s32 = sphi 0, %s30
      %s42 = sphi 0, %s44
      %s45 = sphi 0, %s42
      %s46 = sphi 0, %s45
      %s62 = sphi 0, %s46
      %s66 = sphi 0, %s66
      %s68 = sphi 0, %s66
      %s69 = sphi 0, %s68
      %s83 = sphi 0, %s69
      %s87 = sphi 0, %s87
      %s89 = sphi 0, %s87
      %s90 = sphi 0, %s89
      %s104 = sphi 0, %s90
      %s110 = sphi 0, %s112
      %s113 = sphi 0, %s110
      %s114 = sphi 0, %s113
      %s130 = sphi 0, %s114
      %s136 = sphi 0, %s138
      %s139 = sphi 0, %s136
      %s140 = sphi 0, %s139
      %s156 = sphi 0, %s140
      %s162 = sphi 0, %s164
      %s165 = sphi 0, %s162
      %s166 = sphi 0, %s165
      %s182 = sphi 0, %s166
      %s186 = sphi 0, %s186
      %s188 = sphi 0, %s186
      %s189 = sphi 0, %s188
      %s203 = sphi 0, %s189
      %s209 = sphi 0, %s211
      %s212 = sphi 0, %s209
      %s213 = sphi 0, %s212
      %s229 = sphi 0, %s213
    $region4: #{tpu_custom_call.1} parent=1 // loop_header_branch
      %23 = sbr.rel (%p21) target = $region8
    $region5: #{tpu_custom_call.1} parent=1 // loop_body
      %s25 = ssub.s32 %s20, 1
      %s26 = ssub.s32 %s20, 2
      %s33 = sadd.s32 1, %s28
      %p34 = scmp.ge.s32.totalorder %s33, 1
      %s35 = scalar_select %p34, 0, %s33
      %s36 = sadd.s32 1, %s27
      %s37 = scalar_select %p34, %s36, %s27
      %p38 = scmp.ge.s32.totalorder %s37, 2
      %s39 = scalar_select %p38, 0, %s37
      %s40 = ssub.s32 %s27, %s39
      %p41 = scmp.eq.s32.totalorder %s40, 0
      %s43 = sadd.s32 %s42, 1
      %s44 = scalar_select %p41, %s42, %s43
      %p47 = pneg %p41
      %p48 = scmp.eq.s32.totalorder %s20, 1
      %p49 = por %p47, %p48
      %p50 = scmp.ne.s32.totalorder %s42, %s45
      %p51 = scmp.eq.s32.totalorder %s20, 0
      %p52 = por %p50, %p51
      %p53 = scmp.ne.s32.totalorder %s42, %s45
      %p54 = scmp.eq.s32.totalorder %s25, 1
      %p55 = por %p53, %p54
      %p56 = scmp.ne.s32.totalorder %s45, %s46
      %p57 = scmp.eq.s32.totalorder %s25, 0
      %p58 = por %p56, %p57
      %p59 = scmp.ne.s32.totalorder %s45, %s46
      %p60 = scmp.eq.s32.totalorder %s26, 1
      %p61 = por %p59, %p60
      %p63 = scmp.ne.s32.totalorder %s46, %s62
      %p64 = scmp.eq.s32.totalorder %s26, 0
      %p65 = por %p63, %p64
      %s67 = sadd.s32 %s66, 1
      %p70 = scmp.eq.s32.totalorder %s20, 1
      %p71 = scmp.ne.s32.totalorder %s66, %s68
      %p72 = scmp.eq.s32.totalorder %s20, 0
      %p73 = por %p71, %p72
      %p74 = scmp.ne.s32.totalorder %s66, %s68
      %p75 = scmp.eq.s32.totalorder %s25, 1
      %p76 = por %p74, %p75
      %p77 = scmp.ne.s32.totalorder %s68, %s69
      %p78 = scmp.eq.s32.totalorder %s25, 0
      %p79 = por %p77, %p78
      %p80 = scmp.ne.s32.totalorder %s68, %s69
      %p81 = scmp.eq.s32.totalorder %s26, 1
      %p82 = por %p80, %p81
      %p84 = scmp.ne.s32.totalorder %s69, %s83
      %p85 = scmp.eq.s32.totalorder %s26, 0
      %p86 = por %p84, %p85
      %s88 = sadd.s32 %s87, 1
      %p91 = scmp.eq.s32.totalorder %s20, 1
      %p92 = scmp.ne.s32.totalorder %s87, %s89
      %p93 = scmp.eq.s32.totalorder %s20, 0
      %p94 = por %p92, %p93
      %p95 = scmp.ne.s32.totalorder %s87, %s89
      %p96 = scmp.eq.s32.totalorder %s25, 1
      %p97 = por %p95, %p96
      %p98 = scmp.ne.s32.totalorder %s89, %s90
      %p99 = scmp.eq.s32.totalorder %s25, 0
      %p100 = por %p98, %p99
      %p101 = scmp.ne.s32.totalorder %s89, %s90
      %p102 = scmp.eq.s32.totalorder %s26, 1
      %p103 = por %p101, %p102
      %p105 = scmp.ne.s32.totalorder %s90, %s104
      %p106 = scmp.eq.s32.totalorder %s26, 0
      %p107 = por %p105, %p106
      %s108 = ssub.s32 %s28, %s35
      %p109 = scmp.eq.s32.totalorder %s108, 0
      %s111 = sadd.s32 %s110, 1
      %s112 = scalar_select %p109, %s110, %s111
      %p115 = pneg %p109
      %p116 = scmp.eq.s32.totalorder %s20, 1
      %p117 = por %p115, %p116
      %p118 = scmp.ne.s32.totalorder %s110, %s113
      %p119 = scmp.eq.s32.totalorder %s20, 0
      %p120 = por %p118, %p119
      %p121 = scmp.ne.s32.totalorder %s110, %s113
      %p122 = scmp.eq.s32.totalorder %s25, 1
      %p123 = por %p121, %p122
      %p124 = scmp.ne.s32.totalorder %s113, %s114
      %p125 = scmp.eq.s32.totalorder %s25, 0
      %p126 = por %p124, %p125
      %p127 = scmp.ne.s32.totalorder %s113, %s114
      %p128 = scmp.eq.s32.totalorder %s26, 1
      %p129 = por %p127, %p128
      %p131 = scmp.ne.s32.totalorder %s114, %s130
      %p132 = scmp.eq.s32.totalorder %s26, 0
      %p133 = por %p131, %p132
      %s134 = ssub.s32 %s28, %s35
      %p135 = scmp.eq.s32.totalorder %s134, 0
      %s137 = sadd.s32 %s136, 1
      %s138 = scalar_select %p135, %s136, %s137
      %p141 = pneg %p135
      %p142 = scmp.eq.s32.totalorder %s20, 1
      %p143 = por %p141, %p142
      %p144 = scmp.ne.s32.totalorder %s136, %s139
      %p145 = scmp.eq.s32.totalorder %s20, 0
      %p146 = por %p144, %p145
      %p147 = scmp.ne.s32.totalorder %s136, %s139
      %p148 = scmp.eq.s32.totalorder %s25, 1
      %p149 = por %p147, %p148
      %p150 = scmp.ne.s32.totalorder %s139, %s140
      %p151 = scmp.eq.s32.totalorder %s25, 0
      %p152 = por %p150, %p151
      %p153 = scmp.ne.s32.totalorder %s139, %s140
      %p154 = scmp.eq.s32.totalorder %s26, 1
      %p155 = por %p153, %p154
      %p157 = scmp.ne.s32.totalorder %s140, %s156
      %p158 = scmp.eq.s32.totalorder %s26, 0
      %p159 = por %p157, %p158
      %s160 = ssub.s32 %s28, %s35
      %p161 = scmp.eq.s32.totalorder %s160, 0
      %s163 = sadd.s32 %s162, 1
      %s164 = scalar_select %p161, %s162, %s163
      %p167 = pneg %p161
      %p168 = scmp.eq.s32.totalorder %s20, 1
      %p169 = por %p167, %p168
      %p170 = scmp.ne.s32.totalorder %s162, %s165
      %p171 = scmp.eq.s32.totalorder %s20, 0
      %p172 = por %p170, %p171
      %p173 = scmp.ne.s32.totalorder %s162, %s165
      %p174 = scmp.eq.s32.totalorder %s25, 1
      %p175 = por %p173, %p174
      %p176 = scmp.ne.s32.totalorder %s165, %s166
      %p177 = scmp.eq.s32.totalorder %s25, 0
      %p178 = por %p176, %p177
      %p179 = scmp.ne.s32.totalorder %s165, %s166
      %p180 = scmp.eq.s32.totalorder %s26, 1
      %p181 = por %p179, %p180
      %p183 = scmp.ne.s32.totalorder %s166, %s182
      %p184 = scmp.eq.s32.totalorder %s26, 0
      %p185 = por %p183, %p184
      %s187 = sadd.s32 %s186, 1
      %p190 = scmp.eq.s32.totalorder %s20, 1
      %p191 = scmp.ne.s32.totalorder %s186, %s188
      %p192 = scmp.eq.s32.totalorder %s20, 0
      %p193 = por %p191, %p192
      %p194 = scmp.ne.s32.totalorder %s186, %s188
      %p195 = scmp.eq.s32.totalorder %s25, 1
      %p196 = por %p194, %p195
      %p197 = scmp.ne.s32.totalorder %s188, %s189
      %p198 = scmp.eq.s32.totalorder %s25, 0
      %p199 = por %p197, %p198
      %p200 = scmp.ne.s32.totalorder %s188, %s189
      %p201 = scmp.eq.s32.totalorder %s26, 1
      %p202 = por %p200, %p201
      %p204 = scmp.ne.s32.totalorder %s189, %s203
      %p205 = scmp.eq.s32.totalorder %s26, 0
      %p206 = por %p204, %p205
      %s207 = ssub.s32 %s27, %s39
      %p208 = scmp.eq.s32.totalorder %s207, 0
      %s210 = sadd.s32 %s209, 1
      %s211 = scalar_select %p208, %s209, %s210
      %p214 = pneg %p208
      %p215 = scmp.eq.s32.totalorder %s20, 1
      %p216 = por %p214, %p215
      %p217 = scmp.ne.s32.totalorder %s209, %s212
      %p218 = scmp.eq.s32.totalorder %s20, 0
      %p219 = por %p217, %p218
      %p220 = scmp.ne.s32.totalorder %s209, %s212
      %p221 = scmp.eq.s32.totalorder %s25, 1
      %p222 = por %p220, %p221
      %p223 = scmp.ne.s32.totalorder %s212, %s213
      %p224 = scmp.eq.s32.totalorder %s25, 0
      %p225 = por %p223, %p224
      %p226 = scmp.ne.s32.totalorder %s212, %s213
      %p227 = scmp.eq.s32.totalorder %s26, 1
      %p228 = por %p226, %p227
      %p230 = scmp.ne.s32.totalorder %s213, %s229
      %p231 = scmp.eq.s32.totalorder %s26, 0
      %p232 = por %p230, %p231
      %p233 = scmp.le.s32.totalorder 1, %s20
      %p234 = scmp.lt.s32.totalorder %s20, 3
      %p235 = pnand %p233, %p234
      %p236 = pneg %p235
      // Predicated region
      $region9: #{tpu_custom_call.1} parent=5 // pred_check
        _
      $region10: #{tpu_custom_call.1} parent=5 // pred_check_branch
        %238 = sbr.rel (%p235) target = $region12
      $region11: #{tpu_custom_call.1} parent=5 // pred_region
        %s239 = ssub.s32 %s20, 1
        // Predicated region
        $region13: #{tpu_custom_call.1} parent=11 // pred_check
          %p240 = pneg %p79
        $region14: #{tpu_custom_call.1} parent=11 // pred_check_branch
          %242 = sbr.rel (%p240) target = $region16
        $region15: #{tpu_custom_call.1} parent=11 // pred_region
          _
        $region16: #{tpu_custom_call.1} parent=11 // pred_fallthru
          _
        // Predicated region
        $region17: #{tpu_custom_call.1} parent=11 // pred_check
          %p243 = pneg %p100
        $region18: #{tpu_custom_call.1} parent=11 // pred_check_branch
          %245 = sbr.rel (%p243) target = $region20
        $region19: #{tpu_custom_call.1} parent=11 // pred_region
          _
        $region20: #{tpu_custom_call.1} parent=11 // pred_fallthru
          _
        // Predicated region
        $region21: #{tpu_custom_call.1} parent=11 // pred_check
          %p246 = pneg %p126
        $region22: #{tpu_custom_call.1} parent=11 // pred_check_branch
          %248 = sbr.rel (%p246) target = $region24
        $region23: #{tpu_custom_call.1} parent=11 // pred_region
          %s250 = ssub.s32 1024, 1024
          %251 = vsyncadd [#allocation8], %s250
          %s252 = smul.addr %s30, 64
          %s253 = scalar_lea.hbm %s3, %s252
          %s254 = sshll.u32 [#allocation7], 4
          %s255 = int_to_ptr.vmem [resolvable:$true] %s254
          %260 = dma.hbm_to_vmem [thread:$0]  %s253, 1024, %s255, [#allocation8], 64, 64, 4
        $region24: #{tpu_custom_call.1} parent=11 // pred_fallthru
          _
        // Predicated region
        $region25: #{tpu_custom_call.1} parent=11 // pred_check
          %p261 = pneg %p152
        $region26: #{tpu_custom_call.1} parent=11 // pred_check_branch
          %263 = sbr.rel (%p261) target = $region28
        $region27: #{tpu_custom_call.1} parent=11 // pred_region
          %p264 = scmp.lt.s32.totalorder %s30, 0
          %s265 = scalar_select %p264, %s30, 0
          %s266 = scalar_lea.vmem %s4, %s265
        $region28: #{tpu_custom_call.1} parent=11 // pred_fallthru
          _
        // Predicated region
        $region29: #{tpu_custom_call.1} parent=11 // pred_check
          %p267 = pneg %p178
        $region30: #{tpu_custom_call.1} parent=11 // pred_check_branch
          %269 = sbr.rel (%p267) target = $region32
        $region31: #{tpu_custom_call.1} parent=11 // pred_region
          %s270 = smul.u32 16, %s30
          %s272 = ssub.s32 1024, 1024
          %273 = vsyncadd [#allocation8], %s272
          %s274 = smul.addr %s270, 64
          %s275 = scalar_lea.hbm %s5, %s274
          %s276 = sshll.u32 [#allocation9], 4
          %s277 = int_to_ptr.vmem [resolvable:$true] %s276
          %282 = dma.hbm_to_vmem [thread:$0]  %s275, 1024, %s277, [#allocation8], 64, 64, 4
        $region32: #{tpu_custom_call.1} parent=11 // pred_fallthru
          _
        // Predicated region
        $region33: #{tpu_custom_call.1} parent=11 // pred_check
          %p283 = pneg %p199
        $region34: #{tpu_custom_call.1} parent=11 // pred_check_branch
          %285 = sbr.rel (%p283) target = $region36
        $region35: #{tpu_custom_call.1} parent=11 // pred_region
          _
        $region36: #{tpu_custom_call.1} parent=11 // pred_fallthru
          _
      $region12: #{tpu_custom_call.1} parent=5 // pred_fallthru
        _
      %p286 = scmp.lt.s32.totalorder %s20, 2
      // Predicated region
      $region37: #{tpu_custom_call.1} parent=5 // pred_check
        %p287 = pneg %p286
      $region38: #{tpu_custom_call.1} parent=5 // pred_check_branch
        %289 = sbr.rel (%p287) target = $region40
      $region39: #{tpu_custom_call.1} parent=5 // pred_region
        // Predicated region
        $region41: #{tpu_custom_call.1} parent=39 // pred_check
          %p290 = pneg %p52
        $region42: #{tpu_custom_call.1} parent=39 // pred_check_branch
          %292 = sbr.rel (%p290) target = $region44
        $region43: #{tpu_custom_call.1} parent=39 // pred_region
          %s293 = sand.u32 %s42, 1
          %s294 = scalar_lea.sflag [#allocation5], %s293
          %s295 = sand.u32 %s42, 1
          %s296 = smul.addr %s295, 8
          %s297 = scalar_lea.vmem [#allocation4], %s296
          %s299 = ssub.s32 128, 128
          %300 = vsyncadd %s294, %s299
          %s301 = smul.addr %s27, 128
          %s302 = scalar_lea.hbm %s0, %s301
          %s304 = sshll.u32 %s297, 4
          %s305 = int_to_ptr.vmem [resolvable:$true] %s304
          %307 = dma.hbm_to_vmem [thread:$0]  %s302, 128, %s305, %s294
        $region44: #{tpu_custom_call.1} parent=39 // pred_fallthru
          _
      $region40: #{tpu_custom_call.1} parent=5 // pred_fallthru
        _
      %p308 = scmp.le.s32.totalorder 1, %s20
      %p309 = scmp.lt.s32.totalorder %s20, 3
      %p310 = pnand %p308, %p309
      %p311 = pneg %p310
      // Predicated region
      $region45: #{tpu_custom_call.1} parent=5 // pred_check
        _
      $region46: #{tpu_custom_call.1} parent=5 // pred_check_branch
        %313 = sbr.rel (%p310) target = $region48
      $region47: #{tpu_custom_call.1} parent=5 // pred_region
        %s314 = ssub.s32 %s20, 1
        %s315 = sand.u32 %s45, 1
        %s316 = scalar_lea.sflag [#allocation5], %s315
        %s317 = sand.u32 %s45, 1
        %s318 = smul.addr %s317, 8
        %s319 = scalar_lea.vmem [#allocation4], %s318
        // Predicated region
        $region49: #{tpu_custom_call.1} parent=47 // pred_check
          %p320 = pneg %p58
        $region50: #{tpu_custom_call.1} parent=47 // pred_check_branch
          %322 = sbr.rel (%p320) target = $region52
        $region51: #{tpu_custom_call.1} parent=47 // pred_region
          %323 = dma.done %s316, 128
        $region52: #{tpu_custom_call.1} parent=47 // pred_fallthru
          _
        // Predicated region
        $region53: #{tpu_custom_call.1} parent=47 // pred_check
          %p324 = pneg %p126
        $region54: #{tpu_custom_call.1} parent=47 // pred_check_branch
          %326 = sbr.rel (%p324) target = $region56
        $region55: #{tpu_custom_call.1} parent=47 // pred_region
          %327 = dma.done [#allocation8], 1024
        $region56: #{tpu_custom_call.1} parent=47 // pred_fallthru
          _
        // Predicated region
        $region57: #{tpu_custom_call.1} parent=47 // pred_check
          %p328 = pneg %p178
        $region58: #{tpu_custom_call.1} parent=47 // pred_check_branch
          %330 = sbr.rel (%p328) target = $region60
        $region59: #{tpu_custom_call.1} parent=47 // pred_region
          %331 = dma.done [#allocation8], 1024
        $region60: #{tpu_custom_call.1} parent=47 // pred_fallthru
          _
        %s332 = sand.u32 %s45, 1
        %s333 = scalar_lea.sflag [#allocation5], %s332
        %s334 = sand.u32 %s45, 1
        %s335 = smul.addr %s334, 8
        %s336 = scalar_lea.vmem [#allocation4], %s335
        %p337 = pneg %p58
        %p338 = pneg %p55
        %p339 = pneg %p79
        %p340 = pneg %p76
        %p341 = pneg %p100
        %p342 = pneg %p97
        %p343 = pneg %p126
        %p344 = pneg %p123
        %p345 = scmp.lt.s32.totalorder %s30, 0
        %s346 = scalar_select %p345, %s30, 0
        %s347 = scalar_lea.vmem %s4, %s346
        %p348 = pneg %p152
        %p349 = pneg %p149
        %p350 = pneg %p178
        %p351 = pneg %p175
        %p352 = pneg %p199
        %p353 = pneg %p196
        %p354 = pneg %p225
        %p355 = pneg %p222
        %s356 = sand.u32 %s212, 1
        %s357 = scalar_lea.sflag [#allocation6], %s356
        %s358 = sand.u32 %s212, 1
        %s359 = smul.addr %s358, 8
        %s360 = scalar_lea.vmem [#allocation10], %s359
        %p361 = scmp.lt.s32.totalorder %s30, 0
        %s362 = scalar_select %p361, %s30, 0
        %s363 = scalar_lea.vmem %s4, %s362
        %s364 = smul.u32 16, %s30
        %p366 = scmp.eq.s32.totalorder %s30, 0
        // Predicated region
        $region61: #{tpu_custom_call.1} parent=47 // pred_check
          %p367 = pneg %p366
        $region62: #{tpu_custom_call.1} parent=47 // pred_check_branch
          %369 = sbr.rel (%p367) target = $region64
        $region63: #{tpu_custom_call.1} parent=47 // pred_region
          %v370 = vld [vmem:[%s319] sm:$0xff]
          %v371 = vlaneseq
          %v372 = vand.u32 %v371, 127
          %vm373 = vcmp.lt.s32.totalorder %v372, 32
          %374 = vadd.xlane.f32.xlu0 %v370
          %v375 = vpop.xlane.xlu0 %374
          %v376 = vmul.f32 %v375, 0.03125
          %v377 = vsub.f32 %v370, %v376
          %v378 = vsel %vm373, 1, 0
          %vm379 = vcmp.eq.s32.totalorder %v378, 1
          %v380 = vsel %vm379, %v377, 0.0
          %v381 = vmul.f32 %v380, %v380
          %382 = vadd.xlane.f32.xlu0 %v381
          %v383 = vpop.xlane.xlu0 %382
          %v384 = vmul.f32 %v383, 0.03125
          %v385 = vadd.f32 %v384, 1e-06
          %v386 = vrsqrt.pop %v385
          %v387 = vmul.f32 %v380, %v386
          %v388 = vld [vmem:[%s1] sm:$0x1]
          %v390 = vlaneseq
          %v391 = vshrl.u32 %v390, 7
          %v392 = vsub.s32 0, %v391
          %v393 = vrot.slane %v388, %v392
          %v395 = vmul.f32 %v387, %v393
          %v396 = vld [vmem:[%s2] sm:$0x1]
          %v398 = vlaneseq
          %v399 = vshrl.u32 %v398, 7
          %v400 = vsub.s32 0, %v399
          %v401 = vrot.slane %v396, %v400
          %v403 = vadd.f32 %v395, %v401
          %v404 = vpack.c.bf16 %v403, %v403
          %405 = vst [vmem:[#allocation2] sm:$0xf] %v404
          %406 = vst [vmem:[#allocation3] sm:$0xff] 0.0
        $region64: #{tpu_custom_call.1} parent=47 // pred_fallthru
          _
        %v407 = vld [vmem:[#allocation2] sm:$0xf]
        %v408 = vld [vmem:[#allocation7] sm:$0xf]
        %v409 = vld [vmem:[#allocation7 + $0x4] sm:$0xf]
        %v410 = vld [vmem:[#allocation7 + $0x8] sm:$0xf]
        %v411 = vld [vmem:[#allocation7 + $0xc] sm:$0xf]
        %v412 = vld [vmem:[#allocation7 + $0x10] sm:$0xf]
        %v413 = vld [vmem:[#allocation7 + $0x14] sm:$0xf]
        %v414 = vld [vmem:[#allocation7 + $0x18] sm:$0xf]
        %v415 = vld [vmem:[#allocation7 + $0x1c] sm:$0xf]
        %v416 = vld [vmem:[#allocation7 + $0x20] sm:$0xf]
        %v417 = vld [vmem:[#allocation7 + $0x24] sm:$0xf]
        %v418 = vld [vmem:[#allocation7 + $0x28] sm:$0xf]
        %v419 = vld [vmem:[#allocation7 + $0x2c] sm:$0xf]
        %v420 = vld [vmem:[#allocation7 + $0x30] sm:$0xf]
        %v421 = vld [vmem:[#allocation7 + $0x34] sm:$0xf]
        %v422 = vld [vmem:[#allocation7 + $0x38] sm:$0xf]
        %v423 = vld [vmem:[#allocation7 + $0x3c] sm:$0xf]
        %v424 = vld [vmem:[%s363] sm:$0x1]
        %v426 = vlaneseq
        %v427 = vshrl.u32 %v426, 7
        %v428 = vsub.s32 0, %v427
        %v429 = vrot.slane %v424, %v428
        %v447 = vunpack.c.l.b16 %v408
        %v448 = vunpack.c.l.b16 %v409
        %v449 = vunpack.c.l.b16 %v410
        %v450 = vunpack.c.l.b16 %v411
        %v451 = vunpack.c.l.b16 %v412
        %v452 = vunpack.c.l.b16 %v413
        %v453 = vunpack.c.l.b16 %v414
        %v454 = vunpack.c.l.b16 %v415
        %v455 = vunpack.c.l.b16 %v416
        %v456 = vunpack.c.l.b16 %v417
        %v457 = vunpack.c.l.b16 %v418
        %v458 = vunpack.c.l.b16 %v419
        %v459 = vunpack.c.l.b16 %v420
        %v460 = vunpack.c.l.b16 %v421
        %v461 = vunpack.c.l.b16 %v422
        %v462 = vunpack.c.l.b16 %v423
        %v463 = vpack.c.b16 %v448, %v447
        %v464 = vpack.c.b16 %v450, %v449
        %v465 = vpack.c.b16 %v452, %v451
        %v466 = vpack.c.b16 %v454, %v453
        %v467 = vpack.c.b16 %v456, %v455
        %v468 = vpack.c.b16 %v458, %v457
        %v469 = vpack.c.b16 %v460, %v459
        %v470 = vpack.c.b16 %v462, %v461
        %479 = vmatprep.subr.bf16.mxu0 0
        %480 = vmatpush1.bf16.msra.mxu0 %v470
        %481 = vmatprep.subr.bf16.mxu0 0
        %482 = vmatpush1.bf16.msra.mxu0 %v469
        %483 = vmatprep.subr.bf16.mxu0 0
        %484 = vmatpush1.bf16.msra.mxu0 %v468
        %485 = vmatprep.subr.bf16.mxu0 0
        %486 = vmatpush1.bf16.msra.mxu0 %v467
        %487 = vmatprep.subr.bf16.mxu0 0
        %488 = vmatpush1.bf16.msra.mxu0 %v466
        %489 = vmatprep.subr.bf16.mxu0 0
        %490 = vmatpush1.bf16.msra.mxu0 %v465
        %491 = vmatprep.subr.bf16.mxu0 0
        %492 = vmatpush1.bf16.msra.mxu0 %v464
        %493 = vmatprep.subr.bf16.mxu0 0
        %494 = vmatpush1.bf16.msra.mxu0 %v463
        %495 = vmatprep.subr.bf16.mxu0 0
        %496 = vmatpush2.bf16.msra.mxu0 0
        %497 = vmatprep.subr.bf16.mxu0 0
        %498 = vmatpush2.bf16.msra.mxu0 0
        %499 = vmatprep.subr.bf16.mxu0 0
        %500 = vmatpush2.bf16.msra.mxu0 0
        %501 = vmatprep.subr.bf16.mxu0 0
        %502 = vmatpush2.bf16.msra.mxu0 0
        %503 = vmatprep.subr.bf16.mxu0 0
        %504 = vmatpush2.bf16.msra.mxu0 0
        %505 = vmatprep.subr.bf16.mxu0 0
        %506 = vmatpush2.bf16.msra.mxu0 0
        %507 = vmatprep.subr.bf16.mxu0 0
        %508 = vmatpush2.bf16.msra.mxu0 0
        %509 = vmatprep.subr.bf16.mxu0 0
        %510 = vmatpush2.bf16.msra.mxu0 0
        %511 = vmatprep.mubr.bf16.mxu0 0
        %512 = vmatmul.mubr.bf16.gmra.mxu0 %v407
        %v513 = vpop.f32.mrf.mxu0
        %v514 = vadd.f32 %v429, %v513
        %v515 = vpop.f32.mrf.mxu0
        %v516 = vpop.f32.mrf.mxu0
        %v517 = vpop.f32.mrf.mxu0
        %518 = vdwg.mxu0
        %v519 = vmax.f32 %v514, 0.0
        %v520 = vld [vmem:[#allocation3] sm:$0xff]
        %v521 = vpack.c.bf16 %v519, %v519
        %v522 = vld [vmem:[#allocation9] sm:$0xf]
        %v523 = vld [vmem:[#allocation9 + $0x4] sm:$0xf]
        %v524 = vld [vmem:[#allocation9 + $0x8] sm:$0xf]
        %v525 = vld [vmem:[#allocation9 + $0xc] sm:$0xf]
        %v526 = vld [vmem:[#allocation9 + $0x10] sm:$0xf]
        %v527 = vld [vmem:[#allocation9 + $0x14] sm:$0xf]
        %v528 = vld [vmem:[#allocation9 + $0x18] sm:$0xf]
        %v529 = vld [vmem:[#allocation9 + $0x1c] sm:$0xf]
        %v530 = vld [vmem:[#allocation9 + $0x20] sm:$0xf]
        %v531 = vld [vmem:[#allocation9 + $0x24] sm:$0xf]
        %v532 = vld [vmem:[#allocation9 + $0x28] sm:$0xf]
        %v533 = vld [vmem:[#allocation9 + $0x2c] sm:$0xf]
        %v534 = vld [vmem:[#allocation9 + $0x30] sm:$0xf]
        %v535 = vld [vmem:[#allocation9 + $0x34] sm:$0xf]
        %v536 = vld [vmem:[#allocation9 + $0x38] sm:$0xf]
        %v537 = vld [vmem:[#allocation9 + $0x3c] sm:$0xf]
        %v554 = vunpack.c.l.b16 %v522
        %v555 = vunpack.c.l.b16 %v523
        %v556 = vunpack.c.l.b16 %v524
        %v557 = vunpack.c.l.b16 %v525
        %v558 = vunpack.c.l.b16 %v526
        %v559 = vunpack.c.l.b16 %v527
        %v560 = vunpack.c.l.b16 %v528
        %v561 = vunpack.c.l.b16 %v529
        %v562 = vunpack.c.l.b16 %v530
        %v563 = vunpack.c.l.b16 %v531
        %v564 = vunpack.c.l.b16 %v532
        %v565 = vunpack.c.l.b16 %v533
        %v566 = vunpack.c.l.b16 %v534
        %v567 = vunpack.c.l.b16 %v535
        %v568 = vunpack.c.l.b16 %v536
        %v569 = vunpack.c.l.b16 %v537
        %v570 = vpack.c.b16 %v555, %v554
        %v571 = vpack.c.b16 %v557, %v556
        %v572 = vpack.c.b16 %v559, %v558
        %v573 = vpack.c.b16 %v561, %v560
        %v574 = vpack.c.b16 %v563, %v562
        %v575 = vpack.c.b16 %v565, %v564
        %v576 = vpack.c.b16 %v567, %v566
        %v577 = vpack.c.b16 %v569, %v568
        %586 = vmatprep.subr.bf16.mxu0 0
        %587 = vmatpush1.bf16.msra.mxu0 %v577
        %588 = vmatprep.subr.bf16.mxu0 0
        %589 = vmatpush1.bf16.msra.mxu0 %v576
        %590 = vmatprep.subr.bf16.mxu0 0
        %591 = vmatpush1.bf16.msra.mxu0 %v575
        %592 = vmatprep.subr.bf16.mxu0 0
        %593 = vmatpush1.bf16.msra.mxu0 %v574
        %594 = vmatprep.subr.bf16.mxu0 0
        %595 = vmatpush1.bf16.msra.mxu0 %v573
        %596 = vmatprep.subr.bf16.mxu0 0
        %597 = vmatpush1.bf16.msra.mxu0 %v572
        %598 = vmatprep.subr.bf16.mxu0 0
        %599 = vmatpush1.bf16.msra.mxu0 %v571
        %600 = vmatprep.subr.bf16.mxu0 0
        %601 = vmatpush1.bf16.msra.mxu0 %v570
        %602 = vmatprep.subr.bf16.mxu0 0
        %603 = vmatpush2.bf16.msra.mxu0 0
        %604 = vmatprep.subr.bf16.mxu0 0
        %605 = vmatpush2.bf16.msra.mxu0 0
        %606 = vmatprep.subr.bf16.mxu0 0
        %607 = vmatpush2.bf16.msra.mxu0 0
        %608 = vmatprep.subr.bf16.mxu0 0
        %609 = vmatpush2.bf16.msra.mxu0 0
        %610 = vmatprep.subr.bf16.mxu0 0
        %611 = vmatpush2.bf16.msra.mxu0 0
        %612 = vmatprep.subr.bf16.mxu0 0
        %613 = vmatpush2.bf16.msra.mxu0 0
        %614 = vmatprep.subr.bf16.mxu0 0
        %615 = vmatpush2.bf16.msra.mxu0 0
        %616 = vmatprep.subr.bf16.mxu0 0
        %617 = vmatpush2.bf16.msra.mxu0 0
        %618 = vmatprep.mubr.bf16.mxu0 0
        %619 = vmatmul.mubr.bf16.gmra.mxu0 %v521
        %v620 = vpop.f32.mrf.mxu0
        %v621 = vadd.f32 0.0, %v620
        %v622 = vpop.f32.mrf.mxu0
        %v623 = vpop.f32.mrf.mxu0
        %v624 = vpop.f32.mrf.mxu0
        %625 = vdwg.mxu0
        %v626 = vadd.f32 %v520, %v621
        %627 = vst [vmem:[#allocation3] sm:$0xff] %v626
        // Predicated region
        $region65: #{tpu_custom_call.1} parent=47 // pred_check
          %p628 = pneg %p366
        $region66: #{tpu_custom_call.1} parent=47 // pred_check_branch
          %630 = sbr.rel (%p628) target = $region68
        $region67: #{tpu_custom_call.1} parent=47 // pred_region
          %v631 = vld [vmem:[#allocation3] sm:$0xff]
          %v632 = vld [vmem:[%s6] sm:$0x1]
          %v634 = vlaneseq
          %v635 = vshrl.u32 %v634, 7
          %v636 = vsub.s32 0, %v635
          %v637 = vrot.slane %v632, %v636
          %v639 = vadd.f32 %v631, %v637
          %v640 = vld [vmem:[%s319] sm:$0xff]
          %v641 = vadd.f32 %v639, %v640
          %642 = vst [vmem:[%s360] sm:$0xff] %v641
        $region68: #{tpu_custom_call.1} parent=47 // pred_fallthru
          _
        %s643 = sand.u32 %s212, 1
        %s644 = scalar_lea.sflag [#allocation6], %s643
        %s645 = sand.u32 %s212, 1
        %s646 = smul.addr %s645, 8
        %s647 = scalar_lea.vmem [#allocation10], %s646
        // Predicated region
        $region69: #{tpu_custom_call.1} parent=47 // pred_check
          %p648 = pneg %p222
        $region70: #{tpu_custom_call.1} parent=47 // pred_check_branch
          %650 = sbr.rel (%p648) target = $region72
        $region71: #{tpu_custom_call.1} parent=47 // pred_region
          %s652 = ssub.s32 128, 128
          %653 = vsyncadd %s644, %s652
          %s654 = smul.addr %s29, 128
          %s655 = scalar_lea.hbm %s7, %s654
          %s657 = sshll.u32 %s647, 4
          %s658 = int_to_ptr.vmem [resolvable:$true] %s657
          %660 = dma.vmem_to_hbm [thread:$0]  %s658, 128, %s655, %s644
        $region72: #{tpu_custom_call.1} parent=47 // pred_fallthru
          _
      $region48: #{tpu_custom_call.1} parent=5 // pred_fallthru
        _
      %p661 = scmp.le.s32.totalorder 2, %s20
      // Predicated region
      $region73: #{tpu_custom_call.1} parent=5 // pred_check
        %p662 = pneg %p661
      $region74: #{tpu_custom_call.1} parent=5 // pred_check_branch
        %664 = sbr.rel (%p662) target = $region76
      $region75: #{tpu_custom_call.1} parent=5 // pred_region
        %s665 = ssub.s32 %s20, 2
        // Predicated region
        $region77: #{tpu_custom_call.1} parent=75 // pred_check
          %p666 = pneg %p228
        $region78: #{tpu_custom_call.1} parent=75 // pred_check_branch
          %668 = sbr.rel (%p666) target = $region80
        $region79: #{tpu_custom_call.1} parent=75 // pred_region
          %s669 = sand.u32 %s213, 1
          %s670 = scalar_lea.sflag [#allocation6], %s669
          %s671 = sand.u32 %s213, 1
          %s672 = smul.addr %s671, 8
          %s673 = scalar_lea.vmem [#allocation10], %s672
          %674 = dma.done %s670, 128
        $region80: #{tpu_custom_call.1} parent=75 // pred_fallthru
          _
      $region76: #{tpu_custom_call.1} parent=5 // pred_fallthru
        _
    $region6: #{tpu_custom_call.1} parent=1 // loop_footer
      %s24 = sadd.s32 1, %s20
    $region7: #{tpu_custom_call.1} parent=1 // loop_footer_branch
      %19 = sbr.rel target = $region3
    $region8: #{tpu_custom_call.1} parent=1 // loop_exit
      _
    %675 = vsyncpa [#allocation5], 1
    %s676 = scalar_lea.sflag [#allocation5], 1
    %677 = vsyncpa %s676, 1
    %678 = vsyncpa [#allocation8], 1
    %679 = vsyncpa [#allocation6], 1
    %s680 = scalar_lea.sflag [#allocation6], 1
    %681 = vsyncpa %s680, 1

</llo_original>
